<compile_context>
chip_gen: v5e
topology: v5e:2x2
jax: 0.10.0
libtpu: 0.0.40
codegen_flags: <defaults>
</compile_context>

<pallas_src>
import functools

import jax
import jax.numpy as jnp
import numpy as np
from jax import lax
from jax.experimental import pallas as pl
from jax.experimental.pallas import tpu as pltpu


def _round_up(x, m):
    return (x + m - 1) // m * m


def _sigmoid(x):
    # EUP-only sigmoid: 0.5 * tanh(0.5 x) + 0.5 (mathematically identical).
    return 0.5 * jnp.tanh(0.5 * x) + 0.5


def _vmem_limit_bytes(estimate):
    """Clamp the requested scoped-VMEM limit to the actual device capacity."""
    cap = 64 << 20
    try:
        cap = int(getattr(pltpu.get_tpu_info(), "vmem_capacity_bytes", cap))
    except Exception:
        pass
    return int(max(min(estimate + (4 << 20), (cap * 3) // 4), 16 << 20))


# --------------------------------------------------------------------------- #
# Stage 1: input -> gate projections for BOTH directions (one big matmul)
# --------------------------------------------------------------------------- #
def _gate_proj_kernel(x_ref, wih_ref, bg_ref, gx_ref):
    gx_ref[...] = (
        jnp.dot(x_ref[...], wih_ref[...], preferred_element_type=jnp.float32)
        + bg_ref[...])


# --------------------------------------------------------------------------- #
# Stage 2: fused bidirectional recurrence (grid over T, state in VMEM scratch)
# --------------------------------------------------------------------------- #
def _bilstm_step_kernel(gxf_ref, gxb_ref, whh_ref, hf_ref, hb_ref,
                        h_scr, c_scr, *, Hp):
    t = pl.program_id(0)

    @pl.when(t == 0)
    def _():
        h_scr[...] = jnp.zeros_like(h_scr)
        c_scr[...] = jnp.zeros_like(c_scr)

    f32 = jnp.float32
    H4 = 4 * Hp
    h = h_scr[...]                      # (B_pad, 2Hp) = [h_fwd | h_bwd]
    c = c_scr[...]

    # One block-diagonal matmul advances forward step t and backward step
    # T-1-t together.  Columns: [fwd i,f,g,o | bwd i,f,g,o], each Hp wide.
    hh = jnp.dot(h, whh_ref[...], preferred_element_type=f32)   # (B_pad, 8Hp)
    gates_f = gxf_ref[...] + hh[:, 0:H4]
    gates_b = gxb_ref[...] + hh[:, H4:2 * H4]

    def cell(gates, c_d):
        i_g = _sigmoid(gates[:, 0 * Hp:1 * Hp])
        f_g = _sigmoid(gates[:, 1 * Hp:2 * Hp])
        g_g = jnp.tanh(gates[:, 2 * Hp:3 * Hp])
        o_g = _sigmoid(gates[:, 3 * Hp:4 * Hp])
        c_new = f_g * c_d + i_g * g_g
        return o_g * jnp.tanh(c_new), c_new

    hf_new, cf_new = cell(gates_f, c[:, 0:Hp])
    hb_new, cb_new = cell(gates_b, c[:, Hp:2 * Hp])

    h_scr[:, 0:Hp] = hf_new
    h_scr[:, Hp:2 * Hp] = hb_new
    c_scr[:, 0:Hp] = cf_new
    c_scr[:, Hp:2 * Hp] = cb_new
    hf_ref[...] = hf_new                # forward hidden of timestep t
    hb_ref[...] = hb_new                # backward hidden of timestep T-1-t


# --------------------------------------------------------------------------- #
# Stage 3: fc + BatchNorm(eval) + ReLU + LayerNorm + residual (row-tiled)
# --------------------------------------------------------------------------- #
def _epilogue_kernel(hf_ref, hb_ref, x_ref, wfcf_ref, wfcb_ref, wres_ref,
                     bfc_ref, bres_ref, bn_s_ref, bn_t_ref, ln_g_ref, ln_b_ref,
                     o_ref, *, H):
    f32 = jnp.float32
    Hp = o_ref.shape[-1]
    y = (jnp.dot(hf_ref[...], wfcf_ref[...], preferred_element_type=f32)
         + jnp.dot(hb_ref[...], wfcb_ref[...], preferred_element_type=f32)
         + bfc_ref[...])
    y = y * bn_s_ref[...] + bn_t_ref[...]            # BatchNorm1d (eval stats)
    y = jnp.maximum(y, 0.0)                          # ReLU
    # LayerNorm statistics over the real H lanes only (pad lanes masked out).
    lane = lax.broadcasted_iota(jnp.int32, (1, Hp), 1)
    mask = (lane < H).astype(f32)
    inv_h = 1.0 / float(H)
    mu = jnp.sum(y * mask, axis=-1, keepdims=True) * inv_h
    d = (y - mu) * mask
    var = jnp.sum(d * d, axis=-1, keepdims=True) * inv_h
    y = d * lax.rsqrt(var + 1e-5) * ln_g_ref[...] + ln_b_ref[...]
    ident = (jnp.dot(x_ref[...], wres_ref[...], preferred_element_type=f32)
             + bres_ref[...])
    o_ref[...] = y + ident                           # residual add


# --------------------------------------------------------------------------- #
# Wrapper: padding / weight packing (pure XLA glue) + three pallas_calls
# --------------------------------------------------------------------------- #
def bilstm_channel_forward(x, p):
    """x: (B, T, n_inputs) float32 -> (B, T, n_outputs) float32."""
    B, T, I = x.shape
    H = p["w_res"].shape[0]
    f32 = jnp.float32

    Hp = _round_up(H, 128)       # lane-pad hidden size
    Ipad = _round_up(I, 128)     # lane-pad input size
    B_pad = _round_up(B, 8)      # sublane-pad batch
    R = T * B_pad

    # Row tile for the parallel stages: a divisor of T so tiling is exact.
    t_chunk = 1
    for d in range(1, T + 1):
        if T % d == 0 and d * B_pad <= 1024:
            t_chunk = d
    RT = t_chunk * B_pad
    n_row_tiles = R // RT

    # ---- x: pad batch/features, time-major flatten (row index = (t, b)) -----
    xp = jnp.zeros((B_pad, T, Ipad), f32).at[:B, :, :I].set(x.astype(f32))
    x_flat = jnp.transpose(xp, (1, 0, 2)).reshape(R, Ipad)

    # ---- fused gate weights: columns [fwd i,f,g,o | bwd i,f,g,o] ------------
    wih = jnp.zeros((Ipad, 8 * Hp), f32)
    whh = jnp.zeros((2 * Hp, 8 * Hp), f32)       # block-diag: h_f rows -> fwd cols
    bg = jnp.zeros((1, 8 * Hp), f32)
    bfwd = (p["b_ih_f"] + p["b_hh_f"]).astype(f32)
    bbwd = (p["b_ih_b"] + p["b_hh_b"]).astype(f32)
    for k in range(4):                           # PyTorch gate order i, f, g, o
        cf = k * Hp
        cb = (4 + k) * Hp
        wih = wih.at[0:I, cf:cf + H].set(p["w_ih_f"][k * H:(k + 1) * H, :].T.astype(f32))
        wih = wih.at[0:I, cb:cb + H].set(p["w_ih_b"][k * H:(k + 1) * H, :].T.astype(f32))
        whh = whh.at[0:H, cf:cf + H].set(p["w_hh_f"][k * H:(k + 1) * H, :].T.astype(f32))
        whh = whh.at[Hp:Hp + H, cb:cb + H].set(p["w_hh_b"][k * H:(k + 1) * H, :].T.astype(f32))
        bg = bg.at[0, cf:cf + H].set(bfwd[k * H:(k + 1) * H])
        bg = bg.at[0, cb:cb + H].set(bbwd[k * H:(k + 1) * H])

    # fc split over the two directions, residual projection, norms ------------
    wfc_f = jnp.zeros((Hp, Hp), f32).at[0:H, 0:H].set(p["w_fc"][:, :H].T.astype(f32))
    wfc_b = jnp.zeros((Hp, Hp), f32).at[0:H, 0:H].set(p["w_fc"][:, H:].T.astype(f32))
    bfc = jnp.zeros((1, Hp), f32).at[0, :H].set(p["b_fc"].astype(f32))
    wres = jnp.zeros((Ipad, Hp), f32).at[0:I, 0:H].set(p["w_res"].T.astype(f32))
    bres = jnp.zeros((1, Hp), f32).at[0, :H].set(p["b_res"].astype(f32))

    def pad_row(v, fill=0.0):
        return jnp.full((1, Hp), fill, f32).at[0, :H].set(jnp.asarray(v, f32))

    bn_scale = pad_row(p["bn_gamma"]) * lax.rsqrt(pad_row(p["bn_var"], 1.0) + 1e-5)
    bn_shift = pad_row(p["bn_beta"]) - pad_row(p["bn_mean"]) * bn_scale
    ln_g = pad_row(p["ln_gamma"])
    ln_b = pad_row(p["ln_beta"])

    # ---- stage 1: gate projections ------------------------------------------
    est1 = 4 * (2 * RT * (Ipad + 8 * Hp) + Ipad * 8 * Hp + 8 * Hp)
    gx = pl.pallas_call(
        _gate_proj_kernel,
        out_shape=jax.ShapeDtypeStruct((R, 8 * Hp), f32),
        grid=(n_row_tiles,),
        in_specs=[
            pl.BlockSpec((RT, Ipad), lambda i: (i, 0)),
            pl.BlockSpec((Ipad, 8 * Hp), lambda i: (0, 0)),
            pl.BlockSpec((1, 8 * Hp), lambda i: (0, 0)),
        ],
        out_specs=pl.BlockSpec((RT, 8 * Hp), lambda i: (i, 0)),
        compiler_params=pltpu.CompilerParams(
            dimension_semantics=("parallel",),
            vmem_limit_bytes=_vmem_limit_bytes(est1)),
    )(x_flat, wih, bg)

    # ---- stage 2: fused bidirectional recurrence ----------------------------
    est2 = 4 * (4 * B_pad * 4 * Hp + 2 * Hp * 8 * Hp
                + 4 * B_pad * 2 * Hp + 4 * B_pad * Hp)
    h_fwd, h_bwd = pl.pallas_call(
        functools.partial(_bilstm_step_kernel, Hp=Hp),
        out_shape=(jax.ShapeDtypeStruct((R, Hp), f32),
                   jax.ShapeDtypeStruct((R, Hp), f32)),
        grid=(T,),
        in_specs=[
            pl.BlockSpec((B_pad, 4 * Hp), lambda t: (t, 0)),           # fwd gates t
            pl.BlockSpec((B_pad, 4 * Hp), lambda t: (T - 1 - t, 1)),   # bwd gates T-1-t
            pl.BlockSpec((2 * Hp, 8 * Hp), lambda t: (0, 0)),          # resident whh
        ],
        out_specs=(pl.BlockSpec((B_pad, Hp), lambda t: (t, 0)),
                   pl.BlockSpec((B_pad, Hp), lambda t: (T - 1 - t, 0))),
        scratch_shapes=[pltpu.VMEM((B_pad, 2 * Hp), f32),   # [h_f | h_b]
                        pltpu.VMEM((B_pad, 2 * Hp), f32)],  # [c_f | c_b]
        compiler_params=pltpu.CompilerParams(
            dimension_semantics=("arbitrary",),
            vmem_limit_bytes=_vmem_limit_bytes(est2)),
    )(gx, gx, whh)

    # ---- stage 3: epilogue ---------------------------------------------------
    est3 = 4 * (2 * RT * (2 * Hp + Ipad + Hp) + 2 * Hp * Hp + Ipad * Hp + 8 * Hp)
    out2d = pl.pallas_call(
        functools.partial(_epilogue_kernel, H=H),
        out_shape=jax.ShapeDtypeStruct((R, Hp), f32),
        grid=(n_row_tiles,),
        in_specs=[
            pl.BlockSpec((RT, Hp), lambda i: (i, 0)),
            pl.BlockSpec((RT, Hp), lambda i: (i, 0)),
            pl.BlockSpec((RT, Ipad), lambda i: (i, 0)),
            pl.BlockSpec((Hp, Hp), lambda i: (0, 0)),
            pl.BlockSpec((Hp, Hp), lambda i: (0, 0)),
            pl.BlockSpec((Ipad, Hp), lambda i: (0, 0)),
        ] + [pl.BlockSpec((1, Hp), lambda i: (0, 0))] * 6,
        out_specs=pl.BlockSpec((RT, Hp), lambda i: (i, 0)),
        compiler_params=pltpu.CompilerParams(
            dimension_semantics=("parallel",),
            vmem_limit_bytes=_vmem_limit_bytes(est3)),
    )(h_fwd, h_bwd, x_flat, wfc_f, wfc_b, wres,
      bfc, bres, bn_scale, bn_shift, ln_g, ln_b)

    out = out2d.reshape(T, B_pad, Hp)[:, :B, :H]            # drop padding
    return jnp.transpose(out, (1, 0, 2))                    # (B, T, H)


# --------------------------------------------------------------------------- #
# Deterministic parameter construction (shapes match the PyTorch __init__)
# --------------------------------------------------------------------------- #
def make_params(key, n_inputs, n_outputs):
    I, H = n_inputs, n_outputs
    ks = jax.random.split(key, 8)

    def kaiming(k, shape, fan_in):   # kaiming_normal_, nonlinearity='linear'
        return jax.random.normal(k, shape, jnp.float32) / jnp.sqrt(fan_in)

    xavier_std = jnp.sqrt(2.0 / (2 * H + H))
    lin_bound = 1.0 / jnp.sqrt(I)

    return dict(
        w_ih_f=kaiming(ks[0], (4 * H, I), I),
        w_hh_f=kaiming(ks[1], (4 * H, H), H),
        b_ih_f=jnp.zeros((4 * H,), jnp.float32),
        b_hh_f=jnp.zeros((4 * H,), jnp.float32),
        w_ih_b=kaiming(ks[2], (4 * H, I), I),
        w_hh_b=kaiming(ks[3], (4 * H, H), H),
        b_ih_b=jnp.zeros((4 * H,), jnp.float32),
        b_hh_b=jnp.zeros((4 * H,), jnp.float32),
        w_fc=jax.random.normal(ks[4], (H, 2 * H), jnp.float32) * xavier_std,
        b_fc=jnp.zeros((H,), jnp.float32),
        w_res=jax.random.uniform(ks[5], (H, I), jnp.float32, -lin_bound, lin_bound),
        b_res=jax.random.uniform(ks[6], (H,), jnp.float32, -lin_bound, lin_bound),
        bn_gamma=jnp.ones((H,), jnp.float32),
        bn_beta=jnp.zeros((H,), jnp.float32),
        bn_mean=jnp.zeros((H,), jnp.float32),
        bn_var=jnp.ones((H,), jnp.float32),
        ln_gamma=jnp.ones((H,), jnp.float32),
        ln_beta=jnp.zeros((H,), jnp.float32),
    )


# --------------------------------------------------------------------------- #
# Pure-JAX reference (same eval-mode semantics) for a correctness check
# --------------------------------------------------------------------------- #
def reference_forward(x, p):
    H = p["w_res"].shape[0]
    B = x.shape[0]
    identity = x @ p["w_res"].T + p["b_res"]

    def direction(w_ih, w_hh, b, reverse):
        gx = x @ w_ih.T + b                      # (B, T, 4H)
        gxt = jnp.swapaxes(gx, 0, 1)             # (T, B, 4H)
        if reverse:
            gxt = gxt[::-1]

        def step(carry, g):
            h, c = carry
            gates = g + h @ w_hh.T
            i = jax.nn.sigmoid(gates[:, :H])
            f = jax.nn.sigmoid(gates[:, H:2 * H])
            gg = jnp.tanh(gates[:, 2 * H:3 * H])
            o = jax.nn.sigmoid(gates[:, 3 * H:])
            c = f * c + i * gg
            h = o * jnp.tanh(c)
            return (h, c), h

        init = (jnp.zeros((B, H), jnp.float32), jnp.zeros((B, H), jnp.float32))
        _, hs = lax.scan(step, init, gxt)
        if reverse:
            hs = hs[::-1]
        return jnp.swapaxes(hs, 0, 1)            # (B, T, H)

    hf = direction(p["w_ih_f"], p["w_hh_f"], p["b_ih_f"] + p["b_hh_f"], False)
    hb = direction(p["w_ih_b"], p["w_hh_b"], p["b_ih_b"] + p["b_hh_b"], True)
    out = jnp.concatenate([hf, hb], axis=-1) @ p["w_fc"].T + p["b_fc"]
    out = (out - p["bn_mean"]) / jnp.sqrt(p["bn_var"] + 1e-5) * p["bn_gamma"] + p["bn_beta"]
    out = jnp.maximum(out, 0.0)
    mu = out.mean(-1, keepdims=True)
    var = ((out - mu) ** 2).mean(-1, keepdims=True)
    out = (out - mu) / jnp.sqrt(var + 1e-5) * p["ln_gamma"] + p["ln_beta"]
    return out + identity


# --------------------------------------------------------------------------- #
if __name__ == "__main__":
    B, T, n_inputs, n_outputs = 2, 8, 16, 32

    key = jax.random.PRNGKey(0)
    k_x, k_p = jax.random.split(key)
    x = jax.random.normal(k_x, (B, T, n_inputs), jnp.float32)
    params = make_params(k_p, n_inputs, n_outputs)

    out = bilstm_channel_forward(x, params)
    out = jax.block_until_ready(out)

    ref = jax.block_until_ready(reference_forward(x, params))
    assert out.shape == (B, T, n_outputs)
    np.testing.assert_allclose(np.asarray(out), np.asarray(ref), rtol=1e-3, atol=1e-3)

    print("KERNEL_OK")
</pallas_src>

<mosaic_0001>
module attributes {stable_mosaic.version = 11 : i64} {
  func.func @_gate_proj_kernel(%arg0: i32, %arg1: memref<64x128xf32, #tpu.memory_space<vmem>>, %arg2: memref<128x1024xf32, #tpu.memory_space<vmem>>, %arg3: memref<1x1024xf32, #tpu.memory_space<vmem>>, %arg4: memref<64x1024xf32, #tpu.memory_space<vmem>>) attributes {dimension_semantics = [#tpu.dimension_semantics<parallel>], iteration_bounds = array<i64: 1>, scalar_prefetch = 0 : i64, scratch_operands = 0 : i64, tpu.core_type = #tpu.core_type<tc>, window_params = [{transform_indices = @transform_0, window_bounds = array<i64: 64, 128>}, {pipeline_mode = #tpu.pipeline_mode<synchronous>, transform_indices = @transform_1, window_bounds = array<i64: 128, 1024>}, {pipeline_mode = #tpu.pipeline_mode<synchronous>, transform_indices = @transform_2, window_bounds = array<i64: 1, 1024>}, {transform_indices = @transform_3, window_bounds = array<i64: 64, 1024>}]} {
    %c0 = arith.constant 0 : index
    %c0_0 = arith.constant 0 : index
    %0 = vector.load %arg1[%c0, %c0_0] : memref<64x128xf32, #tpu.memory_space<vmem>>, vector<64x128xf32>
    %c0_1 = arith.constant 0 : index
    %c0_2 = arith.constant 0 : index
    %1 = vector.load %arg2[%c0_1, %c0_2] : memref<128x1024xf32, #tpu.memory_space<vmem>>, vector<128x1024xf32>
    %cst = arith.constant dense<0.000000e+00> : vector<64x1024xf32>
    %2 = tpu.matmul %0, %1, %cst {dimension_numbers = #tpu.dot_dimension_numbers<[1], [0], [0], [1], [0, 0, 1, 1], [], []>} : vector<64x128xf32>, vector<128x1024xf32>, vector<64x1024xf32> -> vector<64x1024xf32>
    %c0_3 = arith.constant 0 : index
    %c0_4 = arith.constant 0 : index
    %3 = vector.load %arg3[%c0_3, %c0_4] : memref<1x1024xf32, #tpu.memory_space<vmem>>, vector<1x1024xf32>
    %4 = vector.broadcast %3 : vector<1x1024xf32> to vector<64x1024xf32>
    %5 = arith.addf %2, %4 : vector<64x1024xf32>
    %c0_5 = arith.constant 0 : index
    %c0_6 = arith.constant 0 : index
    %6 = vector.load %arg4[%c0_5, %c0_6] : memref<64x1024xf32, #tpu.memory_space<vmem>>, vector<64x1024xf32>
    tpu.vector_store %arg4[%c0_5, %c0_6], %5 {strides = array<i32>} : memref<64x1024xf32, #tpu.memory_space<vmem>>, vector<64x1024xf32>,
    return
  }
  func.func @transform_0(%arg0: i32) -> (i32, i32) {
    %c0_i32 = arith.constant 0 : i32
    %c0_i32_0 = arith.constant 0 : i32
    return %arg0, %c0_i32 : i32, i32
  }
  func.func @transform_1(%arg0: i32) -> (i32, i32) {
    %c0_i32 = arith.constant 0 : i32
    %c0_i32_0 = arith.constant 0 : i32
    %c0_i32_1 = arith.constant 0 : i32
    return %c0_i32, %c0_i32_0 : i32, i32
  }
  func.func @transform_2(%arg0: i32) -> (i32, i32) {
    %c0_i32 = arith.constant 0 : i32
    %c0_i32_0 = arith.constant 0 : i32
    %c0_i32_1 = arith.constant 0 : i32
    return %c0_i32, %c0_i32_0 : i32, i32
  }
  func.func @transform_3(%arg0: i32) -> (i32, i32) {
    %c0_i32 = arith.constant 0 : i32
    %c0_i32_0 = arith.constant 0 : i32
    return %arg0, %c0_i32 : i32, i32
  }
}

</mosaic_0001>

<llo_original>
// kernel: tpu_custom_call.1
$region0: #{tpu_custom_call.1}
  #allocation0 [shape = 'u32[]', space=smem, size = 0x4, offset = 0x4, fixed_abs, tag = 'smem constant byte address 0x4 - core index']
  #allocation1 [shape = 'u32[72,128]{1,0:T(1,128)}', space=vmem, size = 0x9000, scoped, tag = 'internal scratch']
  %s0 = inlined_call_operand.hbm [shape: f32[64,128], index: 0, kind: input, shape index: {}]
  %s1 = inlined_call_operand.hbm [shape: f32[128,1024], index: 1, kind: input, shape index: {}]
  %s2 = inlined_call_operand.hbm [shape: f32[1,1024], index: 2, kind: input, shape index: {}]
  %s3 = inlined_call_operand.hbm [shape: f32[64,1024], index: 3, kind: output, shape index: {}]
  %s4 = sld [smem:[#allocation0]]
  $region34: #{tpu_custom_call.1} parent=0
    _
  %s6 = ssub.s32 1, %s4
  %s7 = scalar_select 0, %s6, %s4
  $region1: #{tpu_custom_call.1} parent=0
    #allocation2 [shape = 'u8[32768]{0}', space=vmem, size = 0x8000, scoped, tag = 'input window, operand 0, single buffered']
    #allocation3 [shape = 's32[1]{0}', space=sflag, size = 0x4, scoped, tag = 'scoped memory for tpu_custom_call.1']
    #allocation4 [shape = 's32[1]{0}', space=sflag, size = 0x4, scoped, tag = 'scoped memory for tpu_custom_call.1']
    #allocation5 [shape = 'u8[524288]{0}', space=vmem, size = 0x80000, scoped, tag = 'input window, operand 1, single buffered']
    #allocation6 [shape = 's32[1]{0}', space=sflag, size = 0x4, scoped, tag = 'scoped memory for tpu_custom_call.1']
    #allocation7 [shape = 'u8[4096]{0}', space=vmem, size = 0x1000, scoped, tag = 'input window, operand 2, single buffered']
    #allocation8 [shape = 'u8[262144]{0}', space=vmem, size = 0x40000, scoped, tag = 'output window, operand 0, single buffered']
    %8 = vsyncpa [#allocation3], 0
    %9 = vsyncpa [#allocation6], 0
    %10 = vsyncpa [#allocation4], 0
    // Predicated region
    $region2: #{tpu_custom_call.1} parent=1 // pred_check
      _
    $region3: #{tpu_custom_call.1} parent=1 // pred_check_branch
      %12 = sbr.rel (0) target = $region5
    $region4: #{tpu_custom_call.1} parent=1 // pred_region
      %14 = vsyncadd [#allocation3], 0
      %s15 = sshll.u32 %s0, 4
      %s16 = int_to_ptr.hbm [resolvable:$true] %s15
      %s17 = sshll.u32 [#allocation2], 4
      %s18 = int_to_ptr.vmem [resolvable:$true] %s17
      %23 = dma.hbm_to_vmem [thread:$0]  %s16, 1024, %s18, [#allocation3], 128, 128, 8
    $region5: #{tpu_custom_call.1} parent=1 // pred_fallthru
      _
    // Predicated region
    $region6: #{tpu_custom_call.1} parent=1 // pred_check
      _
    $region7: #{tpu_custom_call.1} parent=1 // pred_check_branch
      %25 = sbr.rel (0) target = $region9
    $region8: #{tpu_custom_call.1} parent=1 // pred_region
      %27 = vsyncadd [#allocation6], 0
      %s28 = sshll.u32 %s1, 4
      %s29 = int_to_ptr.hbm [resolvable:$true] %s28
      %s30 = sshll.u32 [#allocation5], 4
      %s31 = int_to_ptr.vmem [resolvable:$true] %s30
      %36 = dma.hbm_to_vmem [thread:$0]  %s29, 16384, %s31, [#allocation6], 1024, 1024, 64
    $region9: #{tpu_custom_call.1} parent=1 // pred_fallthru
      _
    // Predicated region
    $region10: #{tpu_custom_call.1} parent=1 // pred_check
      _
    $region11: #{tpu_custom_call.1} parent=1 // pred_check_branch
      %38 = sbr.rel (0) target = $region13
    $region12: #{tpu_custom_call.1} parent=1 // pred_region
      %40 = vsyncadd [#allocation6], 0
      %s42 = sshll.u32 %s2, 4
      %s43 = int_to_ptr.hbm [resolvable:$true] %s42
      %s44 = sshll.u32 [#allocation7], 4
      %s45 = int_to_ptr.vmem [resolvable:$true] %s44
      %47 = dma.hbm_to_vmem [thread:$0]  %s43, 128, %s45, [#allocation6]
    $region13: #{tpu_custom_call.1} parent=1 // pred_fallthru
      _
    // Predicated region
    $region14: #{tpu_custom_call.1} parent=1 // pred_check
      _
    $region15: #{tpu_custom_call.1} parent=1 // pred_check_branch
      %49 = sbr.rel (0) target = $region17
    $region16: #{tpu_custom_call.1} parent=1 // pred_region
      %51 = dma.done [#allocation3], 1024
    $region17: #{tpu_custom_call.1} parent=1 // pred_fallthru
      _
    // Predicated region
    $region18: #{tpu_custom_call.1} parent=1 // pred_check
      _
    $region19: #{tpu_custom_call.1} parent=1 // pred_check_branch
      %53 = sbr.rel (0) target = $region21
    $region20: #{tpu_custom_call.1} parent=1 // pred_region
      %55 = dma.done [#allocation6], 16384
    $region21: #{tpu_custom_call.1} parent=1 // pred_fallthru
      _
    // Predicated region
    $region22: #{tpu_custom_call.1} parent=1 // pred_check
      _
    $region23: #{tpu_custom_call.1} parent=1 // pred_check_branch
      %57 = sbr.rel (0) target = $region25
    $region24: #{tpu_custom_call.1} parent=1 // pred_region
      %59 = dma.done [#allocation6], 128
    $region25: #{tpu_custom_call.1} parent=1 // pred_fallthru
      _
    %v60 = vld [vmem:[#allocation2] sm:$0xff]
    %v61 = vld [vmem:[#allocation2 + $0x8] sm:$0xff]
    %v62 = vld [vmem:[#allocation2 + $0x10] sm:$0xff]
    %v63 = vld [vmem:[#allocation2 + $0x18] sm:$0xff]
    %v64 = vld [vmem:[#allocation2 + $0x20] sm:$0xff]
    %v65 = vld [vmem:[#allocation2 + $0x28] sm:$0xff]
    %v66 = vld [vmem:[#allocation2 + $0x30] sm:$0xff]
    %v67 = vld [vmem:[#allocation2 + $0x38] sm:$0xff]
    %v68 = vld [vmem:[#allocation5] sm:$0xff]
    %v69 = vld [vmem:[#allocation5 + $0x8] sm:$0xff]
    %v70 = vld [vmem:[#allocation5 + $0x10] sm:$0xff]
    %v71 = vld [vmem:[#allocation5 + $0x18] sm:$0xff]
    %v72 = vld [vmem:[#allocation5 + $0x20] sm:$0xff]
    %v73 = vld [vmem:[#allocation5 + $0x28] sm:$0xff]
    %v74 = vld [vmem:[#allocation5 + $0x30] sm:$0xff]
    %v75 = vld [vmem:[#allocation5 + $0x38] sm:$0xff]
    %v76 = vld [vmem:[#allocation5 + $0x40] sm:$0xff]
    %v77 = vld [vmem:[#allocation5 + $0x48] sm:$0xff]
    %v78 = vld [vmem:[#allocation5 + $0x50] sm:$0xff]
    %v79 = vld [vmem:[#allocation5 + $0x58] sm:$0xff]
    %v80 = vld [vmem:[#allocation5 + $0x60] sm:$0xff]
    %v81 = vld [vmem:[#allocation5 + $0x68] sm:$0xff]
    %v82 = vld [vmem:[#allocation5 + $0x70] sm:$0xff]
    %v83 = vld [vmem:[#allocation5 + $0x78] sm:$0xff]
    %v84 = vld [vmem:[#allocation5 + $0x80] sm:$0xff]
    %v85 = vld [vmem:[#allocation5 + $0x88] sm:$0xff]
    %v86 = vld [vmem:[#allocation5 + $0x90] sm:$0xff]
    %v87 = vld [vmem:[#allocation5 + $0x98] sm:$0xff]
    %v88 = vld [vmem:[#allocation5 + $0xa0] sm:$0xff]
    %v89 = vld [vmem:[#allocation5 + $0xa8] sm:$0xff]
    %v90 = vld [vmem:[#allocation5 + $0xb0] sm:$0xff]
    %v91 = vld [vmem:[#allocation5 + $0xb8] sm:$0xff]
    %v92 = vld [vmem:[#allocation5 + $0xc0] sm:$0xff]
    %v93 = vld [vmem:[#allocation5 + $0xc8] sm:$0xff]
    %v94 = vld [vmem:[#allocation5 + $0xd0] sm:$0xff]
    %v95 = vld [vmem:[#allocation5 + $0xd8] sm:$0xff]
    %v96 = vld [vmem:[#allocation5 + $0xe0] sm:$0xff]
    %v97 = vld [vmem:[#allocation5 + $0xe8] sm:$0xff]
    %v98 = vld [vmem:[#allocation5 + $0xf0] sm:$0xff]
    %v99 = vld [vmem:[#allocation5 + $0xf8] sm:$0xff]
    %v100 = vld [vmem:[#allocation5 + $0x100] sm:$0xff]
    %v101 = vld [vmem:[#allocation5 + $0x108] sm:$0xff]
    %v102 = vld [vmem:[#allocation5 + $0x110] sm:$0xff]
    %v103 = vld [vmem:[#allocation5 + $0x118] sm:$0xff]
    %v104 = vld [vmem:[#allocation5 + $0x120] sm:$0xff]
    %v105 = vld [vmem:[#allocation5 + $0x128] sm:$0xff]
    %v106 = vld [vmem:[#allocation5 + $0x130] sm:$0xff]
    %v107 = vld [vmem:[#allocation5 + $0x138] sm:$0xff]
    %v108 = vld [vmem:[#allocation5 + $0x140] sm:$0xff]
    %v109 = vld [vmem:[#allocation5 + $0x148] sm:$0xff]
    %v110 = vld [vmem:[#allocation5 + $0x150] sm:$0xff]
    %v111 = vld [vmem:[#allocation5 + $0x158] sm:$0xff]
    %v112 = vld [vmem:[#allocation5 + $0x160] sm:$0xff]
    %v113 = vld [vmem:[#allocation5 + $0x168] sm:$0xff]
    %v114 = vld [vmem:[#allocation5 + $0x170] sm:$0xff]
    %v115 = vld [vmem:[#allocation5 + $0x178] sm:$0xff]
    %v116 = vld [vmem:[#allocation5 + $0x180] sm:$0xff]
    %v117 = vld [vmem:[#allocation5 + $0x188] sm:$0xff]
    %v118 = vld [vmem:[#allocation5 + $0x190] sm:$0xff]
    %v119 = vld [vmem:[#allocation5 + $0x198] sm:$0xff]
    %v120 = vld [vmem:[#allocation5 + $0x1a0] sm:$0xff]
    %v121 = vld [vmem:[#allocation5 + $0x1a8] sm:$0xff]
    %v122 = vld [vmem:[#allocation5 + $0x1b0] sm:$0xff]
    %v123 = vld [vmem:[#allocation5 + $0x1b8] sm:$0xff]
    %v124 = vld [vmem:[#allocation5 + $0x1c0] sm:$0xff]
    %v125 = vld [vmem:[#allocation5 + $0x1c8] sm:$0xff]
    %v126 = vld [vmem:[#allocation5 + $0x1d0] sm:$0xff]
    %v127 = vld [vmem:[#allocation5 + $0x1d8] sm:$0xff]
    %v128 = vld [vmem:[#allocation5 + $0x1e0] sm:$0xff]
    %v129 = vld [vmem:[#allocation5 + $0x1e8] sm:$0xff]
    %v130 = vld [vmem:[#allocation5 + $0x1f0] sm:$0xff]
    %v131 = vld [vmem:[#allocation5 + $0x1f8] sm:$0xff]
    %v132 = vld [vmem:[#allocation5 + $0x200] sm:$0xff]
    %v133 = vld [vmem:[#allocation5 + $0x208] sm:$0xff]
    %v134 = vld [vmem:[#allocation5 + $0x210] sm:$0xff]
    %v135 = vld [vmem:[#allocation5 + $0x218] sm:$0xff]
    %v136 = vld [vmem:[#allocation5 + $0x220] sm:$0xff]
    %v137 = vld [vmem:[#allocation5 + $0x228] sm:$0xff]
    %v138 = vld [vmem:[#allocation5 + $0x230] sm:$0xff]
    %v139 = vld [vmem:[#allocation5 + $0x238] sm:$0xff]
    %v140 = vld [vmem:[#allocation5 + $0x240] sm:$0xff]
    %v141 = vld [vmem:[#allocation5 + $0x248] sm:$0xff]
    %v142 = vld [vmem:[#allocation5 + $0x250] sm:$0xff]
    %v143 = vld [vmem:[#allocation5 + $0x258] sm:$0xff]
    %v144 = vld [vmem:[#allocation5 + $0x260] sm:$0xff]
    %v145 = vld [vmem:[#allocation5 + $0x268] sm:$0xff]
    %v146 = vld [vmem:[#allocation5 + $0x270] sm:$0xff]
    %v147 = vld [vmem:[#allocation5 + $0x278] sm:$0xff]
    %v148 = vld [vmem:[#allocation5 + $0x280] sm:$0xff]
    %v149 = vld [vmem:[#allocation5 + $0x288] sm:$0xff]
    %v150 = vld [vmem:[#allocation5 + $0x290] sm:$0xff]
    %v151 = vld [vmem:[#allocation5 + $0x298] sm:$0xff]
    %v152 = vld [vmem:[#allocation5 + $0x2a0] sm:$0xff]
    %v153 = vld [vmem:[#allocation5 + $0x2a8] sm:$0xff]
    %v154 = vld [vmem:[#allocation5 + $0x2b0] sm:$0xff]
    %v155 = vld [vmem:[#allocation5 + $0x2b8] sm:$0xff]
    %v156 = vld [vmem:[#allocation5 + $0x2c0] sm:$0xff]
    %v157 = vld [vmem:[#allocation5 + $0x2c8] sm:$0xff]
    %v158 = vld [vmem:[#allocation5 + $0x2d0] sm:$0xff]
    %v159 = vld [vmem:[#allocation5 + $0x2d8] sm:$0xff]
    %v160 = vld [vmem:[#allocation5 + $0x2e0] sm:$0xff]
    %v161 = vld [vmem:[#allocation5 + $0x2e8] sm:$0xff]
    %v162 = vld [vmem:[#allocation5 + $0x2f0] sm:$0xff]
    %v163 = vld [vmem:[#allocation5 + $0x2f8] sm:$0xff]
    %v164 = vld [vmem:[#allocation5 + $0x300] sm:$0xff]
    %v165 = vld [vmem:[#allocation5 + $0x308] sm:$0xff]
    %v166 = vld [vmem:[#allocation5 + $0x310] sm:$0xff]
    %v167 = vld [vmem:[#allocation5 + $0x318] sm:$0xff]
    %v168 = vld [vmem:[#allocation5 + $0x320] sm:$0xff]
    %v169 = vld [vmem:[#allocation5 + $0x328] sm:$0xff]
    %v170 = vld [vmem:[#allocation5 + $0x330] sm:$0xff]
    %v171 = vld [vmem:[#allocation5 + $0x338] sm:$0xff]
    %v172 = vld [vmem:[#allocation5 + $0x340] sm:$0xff]
    %v173 = vld [vmem:[#allocation5 + $0x348] sm:$0xff]
    %v174 = vld [vmem:[#allocation5 + $0x350] sm:$0xff]
    %v175 = vld [vmem:[#allocation5 + $0x358] sm:$0xff]
    %v176 = vld [vmem:[#allocation5 + $0x360] sm:$0xff]
    %v177 = vld [vmem:[#allocation5 + $0x368] sm:$0xff]
    %v178 = vld [vmem:[#allocation5 + $0x370] sm:$0xff]
    %v179 = vld [vmem:[#allocation5 + $0x378] sm:$0xff]
    %v180 = vld [vmem:[#allocation5 + $0x380] sm:$0xff]
    %v181 = vld [vmem:[#allocation5 + $0x388] sm:$0xff]
    %v182 = vld [vmem:[#allocation5 + $0x390] sm:$0xff]
    %v183 = vld [vmem:[#allocation5 + $0x398] sm:$0xff]
    %v184 = vld [vmem:[#allocation5 + $0x3a0] sm:$0xff]
    %v185 = vld [vmem:[#allocation5 + $0x3a8] sm:$0xff]
    %v186 = vld [vmem:[#allocation5 + $0x3b0] sm:$0xff]
    %v187 = vld [vmem:[#allocation5 + $0x3b8] sm:$0xff]
    %v188 = vld [vmem:[#allocation5 + $0x3c0] sm:$0xff]
    %v189 = vld [vmem:[#allocation5 + $0x3c8] sm:$0xff]
    %v190 = vld [vmem:[#allocation5 + $0x3d0] sm:$0xff]
    %v191 = vld [vmem:[#allocation5 + $0x3d8] sm:$0xff]
    %v192 = vld [vmem:[#allocation5 + $0x3e0] sm:$0xff]
    %v193 = vld [vmem:[#allocation5 + $0x3e8] sm:$0xff]
    %v194 = vld [vmem:[#allocation5 + $0x3f0] sm:$0xff]
    %v195 = vld [vmem:[#allocation5 + $0x3f8] sm:$0xff]
    %v196 = vld [vmem:[#allocation7] sm:$0xff]
    %v198 = vperm.slane %v196, 0
    %v199 = vperm.slane %v196, 1
    %v200 = vperm.slane %v196, 2
    %v201 = vperm.slane %v196, 3
    %v202 = vperm.slane %v196, 4
    %v203 = vperm.slane %v196, 5
    %v204 = vperm.slane %v196, 6
    %v205 = vperm.slane %v196, 7
    %214 = vmatpush.msra.mxu0 %v188
    %215 = vmatpush.msra.mxu0 %v180
    %216 = vmatpush.msra.mxu0 %v172
    %217 = vmatpush.msra.mxu0 %v164
    %218 = vmatpush.msra.mxu0 %v156
    %219 = vmatpush.msra.mxu0 %v148
    %220 = vmatpush.msra.mxu0 %v140
    %221 = vmatpush.msra.mxu0 %v132
    %222 = vmatpush.msra.mxu0 %v124
    %223 = vmatpush.msra.mxu0 %v116
    %224 = vmatpush.msra.mxu0 %v108
    %225 = vmatpush.msra.mxu0 %v100
    %226 = vmatpush.msra.mxu0 %v92
    %227 = vmatpush.msra.mxu0 %v84
    %228 = vmatpush.msra.mxu0 %v76
    %229 = vmatpush.msra.mxu0 %v68
    %230 = vmatmul.f32.gmra.mxu0 %v60
    %v231 = vpop.f32.mrf.mxu0
    %v232 = vadd.f32 %v198, %v231
    %233 = vmatmul.f32.gmra.mxu0 %v61
    %v234 = vpop.f32.mrf.mxu0
    %v235 = vadd.f32 %v198, %v234
    %236 = vmatmul.f32.gmra.mxu0 %v62
    %v237 = vpop.f32.mrf.mxu0
    %v238 = vadd.f32 %v198, %v237
    %239 = vmatmul.f32.gmra.mxu0 %v63
    %v240 = vpop.f32.mrf.mxu0
    %v241 = vadd.f32 %v198, %v240
    %242 = vmatmul.f32.gmra.mxu0 %v64
    %v243 = vpop.f32.mrf.mxu0
    %v244 = vadd.f32 %v198, %v243
    %245 = vmatmul.f32.gmra.mxu0 %v65
    %v246 = vpop.f32.mrf.mxu0
    %v247 = vadd.f32 %v198, %v246
    %248 = vmatmul.f32.gmra.mxu0 %v66
    %v249 = vpop.f32.mrf.mxu0
    %v250 = vadd.f32 %v198, %v249
    %251 = vmatmul.f32.gmra.mxu0 %v67
    %v252 = vpop.f32.mrf.mxu0
    %v253 = vadd.f32 %v198, %v252
    %254 = vdwg.mxu0
    %255 = vmatpush.msra.mxu0 %v189
    %256 = vmatpush.msra.mxu0 %v181
    %257 = vmatpush.msra.mxu0 %v173
    %258 = vmatpush.msra.mxu0 %v165
    %259 = vmatpush.msra.mxu0 %v157
    %260 = vmatpush.msra.mxu0 %v149
    %261 = vmatpush.msra.mxu0 %v141
    %262 = vmatpush.msra.mxu0 %v133
    %263 = vmatpush.msra.mxu0 %v125
    %264 = vmatpush.msra.mxu0 %v117
    %265 = vmatpush.msra.mxu0 %v109
    %266 = vmatpush.msra.mxu0 %v101
    %267 = vmatpush.msra.mxu0 %v93
    %268 = vmatpush.msra.mxu0 %v85
    %269 = vmatpush.msra.mxu0 %v77
    %270 = vmatpush.msra.mxu0 %v69
    %271 = vmatmul.f32.gmra.mxu0 %v60
    %v272 = vpop.f32.mrf.mxu0
    %v273 = vadd.f32 %v199, %v272
    %274 = vmatmul.f32.gmra.mxu0 %v61
    %v275 = vpop.f32.mrf.mxu0
    %v276 = vadd.f32 %v199, %v275
    %277 = vmatmul.f32.gmra.mxu0 %v62
    %v278 = vpop.f32.mrf.mxu0
    %v279 = vadd.f32 %v199, %v278
    %280 = vmatmul.f32.gmra.mxu0 %v63
    %v281 = vpop.f32.mrf.mxu0
    %v282 = vadd.f32 %v199, %v281
    %283 = vmatmul.f32.gmra.mxu0 %v64
    %v284 = vpop.f32.mrf.mxu0
    %v285 = vadd.f32 %v199, %v284
    %286 = vmatmul.f32.gmra.mxu0 %v65
    %v287 = vpop.f32.mrf.mxu0
    %v288 = vadd.f32 %v199, %v287
    %289 = vmatmul.f32.gmra.mxu0 %v66
    %v290 = vpop.f32.mrf.mxu0
    %v291 = vadd.f32 %v199, %v290
    %292 = vmatmul.f32.gmra.mxu0 %v67
    %v293 = vpop.f32.mrf.mxu0
    %v294 = vadd.f32 %v199, %v293
    %295 = vdwg.mxu0
    %296 = vmatpush.msra.mxu0 %v190
    %297 = vmatpush.msra.mxu0 %v182
    %298 = vmatpush.msra.mxu0 %v174
    %299 = vmatpush.msra.mxu0 %v166
    %300 = vmatpush.msra.mxu0 %v158
    %301 = vmatpush.msra.mxu0 %v150
    %302 = vmatpush.msra.mxu0 %v142
    %303 = vmatpush.msra.mxu0 %v134
    %304 = vmatpush.msra.mxu0 %v126
    %305 = vmatpush.msra.mxu0 %v118
    %306 = vmatpush.msra.mxu0 %v110
    %307 = vmatpush.msra.mxu0 %v102
    %308 = vmatpush.msra.mxu0 %v94
    %309 = vmatpush.msra.mxu0 %v86
    %310 = vmatpush.msra.mxu0 %v78
    %311 = vmatpush.msra.mxu0 %v70
    %312 = vmatmul.f32.gmra.mxu0 %v60
    %v313 = vpop.f32.mrf.mxu0
    %v314 = vadd.f32 %v200, %v313
    %315 = vmatmul.f32.gmra.mxu0 %v61
    %v316 = vpop.f32.mrf.mxu0
    %v317 = vadd.f32 %v200, %v316
    %318 = vmatmul.f32.gmra.mxu0 %v62
    %v319 = vpop.f32.mrf.mxu0
    %v320 = vadd.f32 %v200, %v319
    %321 = vmatmul.f32.gmra.mxu0 %v63
    %v322 = vpop.f32.mrf.mxu0
    %v323 = vadd.f32 %v200, %v322
    %324 = vmatmul.f32.gmra.mxu0 %v64
    %v325 = vpop.f32.mrf.mxu0
    %v326 = vadd.f32 %v200, %v325
    %327 = vmatmul.f32.gmra.mxu0 %v65
    %v328 = vpop.f32.mrf.mxu0
    %v329 = vadd.f32 %v200, %v328
    %330 = vmatmul.f32.gmra.mxu0 %v66
    %v331 = vpop.f32.mrf.mxu0
    %v332 = vadd.f32 %v200, %v331
    %333 = vmatmul.f32.gmra.mxu0 %v67
    %v334 = vpop.f32.mrf.mxu0
    %v335 = vadd.f32 %v200, %v334
    %336 = vdwg.mxu0
    %337 = vmatpush.msra.mxu0 %v191
    %338 = vmatpush.msra.mxu0 %v183
    %339 = vmatpush.msra.mxu0 %v175
    %340 = vmatpush.msra.mxu0 %v167
    %341 = vmatpush.msra.mxu0 %v159
    %342 = vmatpush.msra.mxu0 %v151
    %343 = vmatpush.msra.mxu0 %v143
    %344 = vmatpush.msra.mxu0 %v135
    %345 = vmatpush.msra.mxu0 %v127
    %346 = vmatpush.msra.mxu0 %v119
    %347 = vmatpush.msra.mxu0 %v111
    %348 = vmatpush.msra.mxu0 %v103
    %349 = vmatpush.msra.mxu0 %v95
    %350 = vmatpush.msra.mxu0 %v87
    %351 = vmatpush.msra.mxu0 %v79
    %352 = vmatpush.msra.mxu0 %v71
    %353 = vmatmul.f32.gmra.mxu0 %v60
    %v354 = vpop.f32.mrf.mxu0
    %v355 = vadd.f32 %v201, %v354
    %356 = vmatmul.f32.gmra.mxu0 %v61
    %v357 = vpop.f32.mrf.mxu0
    %v358 = vadd.f32 %v201, %v357
    %359 = vmatmul.f32.gmra.mxu0 %v62
    %v360 = vpop.f32.mrf.mxu0
    %v361 = vadd.f32 %v201, %v360
    %362 = vmatmul.f32.gmra.mxu0 %v63
    %v363 = vpop.f32.mrf.mxu0
    %v364 = vadd.f32 %v201, %v363
    %365 = vmatmul.f32.gmra.mxu0 %v64
    %v366 = vpop.f32.mrf.mxu0
    %v367 = vadd.f32 %v201, %v366
    %368 = vmatmul.f32.gmra.mxu0 %v65
    %v369 = vpop.f32.mrf.mxu0
    %v370 = vadd.f32 %v201, %v369
    %371 = vmatmul.f32.gmra.mxu0 %v66
    %v372 = vpop.f32.mrf.mxu0
    %v373 = vadd.f32 %v201, %v372
    %374 = vmatmul.f32.gmra.mxu0 %v67
    %v375 = vpop.f32.mrf.mxu0
    %v376 = vadd.f32 %v201, %v375
    %377 = vdwg.mxu0
    %378 = vmatpush.msra.mxu0 %v192
    %379 = vmatpush.msra.mxu0 %v184
    %380 = vmatpush.msra.mxu0 %v176
    %381 = vmatpush.msra.mxu0 %v168
    %382 = vmatpush.msra.mxu0 %v160
    %383 = vmatpush.msra.mxu0 %v152
    %384 = vmatpush.msra.mxu0 %v144
    %385 = vmatpush.msra.mxu0 %v136
    %386 = vmatpush.msra.mxu0 %v128
    %387 = vmatpush.msra.mxu0 %v120
    %388 = vmatpush.msra.mxu0 %v112
    %389 = vmatpush.msra.mxu0 %v104
    %390 = vmatpush.msra.mxu0 %v96
    %391 = vmatpush.msra.mxu0 %v88
    %392 = vmatpush.msra.mxu0 %v80
    %393 = vmatpush.msra.mxu0 %v72
    %394 = vmatmul.f32.gmra.mxu0 %v60
    %v395 = vpop.f32.mrf.mxu0
    %v396 = vadd.f32 %v202, %v395
    %397 = vmatmul.f32.gmra.mxu0 %v61
    %v398 = vpop.f32.mrf.mxu0
    %v399 = vadd.f32 %v202, %v398
    %400 = vmatmul.f32.gmra.mxu0 %v62
    %v401 = vpop.f32.mrf.mxu0
    %v402 = vadd.f32 %v202, %v401
    %403 = vmatmul.f32.gmra.mxu0 %v63
    %v404 = vpop.f32.mrf.mxu0
    %v405 = vadd.f32 %v202, %v404
    %406 = vmatmul.f32.gmra.mxu0 %v64
    %v407 = vpop.f32.mrf.mxu0
    %v408 = vadd.f32 %v202, %v407
    %409 = vmatmul.f32.gmra.mxu0 %v65
    %v410 = vpop.f32.mrf.mxu0
    %v411 = vadd.f32 %v202, %v410
    %412 = vmatmul.f32.gmra.mxu0 %v66
    %v413 = vpop.f32.mrf.mxu0
    %v414 = vadd.f32 %v202, %v413
    %415 = vmatmul.f32.gmra.mxu0 %v67
    %v416 = vpop.f32.mrf.mxu0
    %v417 = vadd.f32 %v202, %v416
    %418 = vdwg.mxu0
    %419 = vmatpush.msra.mxu0 %v193
    %420 = vmatpush.msra.mxu0 %v185
    %421 = vmatpush.msra.mxu0 %v177
    %422 = vmatpush.msra.mxu0 %v169
    %423 = vmatpush.msra.mxu0 %v161
    %424 = vmatpush.msra.mxu0 %v153
    %425 = vmatpush.msra.mxu0 %v145
    %426 = vmatpush.msra.mxu0 %v137
    %427 = vmatpush.msra.mxu0 %v129
    %428 = vmatpush.msra.mxu0 %v121
    %429 = vmatpush.msra.mxu0 %v113
    %430 = vmatpush.msra.mxu0 %v105
    %431 = vmatpush.msra.mxu0 %v97
    %432 = vmatpush.msra.mxu0 %v89
    %433 = vmatpush.msra.mxu0 %v81
    %434 = vmatpush.msra.mxu0 %v73
    %435 = vmatmul.f32.gmra.mxu0 %v60
    %v436 = vpop.f32.mrf.mxu0
    %v437 = vadd.f32 %v203, %v436
    %438 = vmatmul.f32.gmra.mxu0 %v61
    %v439 = vpop.f32.mrf.mxu0
    %v440 = vadd.f32 %v203, %v439
    %441 = vmatmul.f32.gmra.mxu0 %v62
    %v442 = vpop.f32.mrf.mxu0
    %v443 = vadd.f32 %v203, %v442
    %444 = vmatmul.f32.gmra.mxu0 %v63
    %v445 = vpop.f32.mrf.mxu0
    %v446 = vadd.f32 %v203, %v445
    %447 = vmatmul.f32.gmra.mxu0 %v64
    %v448 = vpop.f32.mrf.mxu0
    %v449 = vadd.f32 %v203, %v448
    %450 = vmatmul.f32.gmra.mxu0 %v65
    %v451 = vpop.f32.mrf.mxu0
    %v452 = vadd.f32 %v203, %v451
    %453 = vmatmul.f32.gmra.mxu0 %v66
    %v454 = vpop.f32.mrf.mxu0
    %v455 = vadd.f32 %v203, %v454
    %456 = vmatmul.f32.gmra.mxu0 %v67
    %v457 = vpop.f32.mrf.mxu0
    %v458 = vadd.f32 %v203, %v457
    %459 = vdwg.mxu0
    %460 = vmatpush.msra.mxu0 %v194
    %461 = vmatpush.msra.mxu0 %v186
    %462 = vmatpush.msra.mxu0 %v178
    %463 = vmatpush.msra.mxu0 %v170
    %464 = vmatpush.msra.mxu0 %v162
    %465 = vmatpush.msra.mxu0 %v154
    %466 = vmatpush.msra.mxu0 %v146
    %467 = vmatpush.msra.mxu0 %v138
    %468 = vmatpush.msra.mxu0 %v130
    %469 = vmatpush.msra.mxu0 %v122
    %470 = vmatpush.msra.mxu0 %v114
    %471 = vmatpush.msra.mxu0 %v106
    %472 = vmatpush.msra.mxu0 %v98
    %473 = vmatpush.msra.mxu0 %v90
    %474 = vmatpush.msra.mxu0 %v82
    %475 = vmatpush.msra.mxu0 %v74
    %476 = vmatmul.f32.gmra.mxu0 %v60
    %v477 = vpop.f32.mrf.mxu0
    %v478 = vadd.f32 %v204, %v477
    %479 = vmatmul.f32.gmra.mxu0 %v61
    %v480 = vpop.f32.mrf.mxu0
    %v481 = vadd.f32 %v204, %v480
    %482 = vmatmul.f32.gmra.mxu0 %v62
    %v483 = vpop.f32.mrf.mxu0
    %v484 = vadd.f32 %v204, %v483
    %485 = vmatmul.f32.gmra.mxu0 %v63
    %v486 = vpop.f32.mrf.mxu0
    %v487 = vadd.f32 %v204, %v486
    %488 = vmatmul.f32.gmra.mxu0 %v64
    %v489 = vpop.f32.mrf.mxu0
    %v490 = vadd.f32 %v204, %v489
    %491 = vmatmul.f32.gmra.mxu0 %v65
    %v492 = vpop.f32.mrf.mxu0
    %v493 = vadd.f32 %v204, %v492
    %494 = vmatmul.f32.gmra.mxu0 %v66
    %v495 = vpop.f32.mrf.mxu0
    %v496 = vadd.f32 %v204, %v495
    %497 = vmatmul.f32.gmra.mxu0 %v67
    %v498 = vpop.f32.mrf.mxu0
    %v499 = vadd.f32 %v204, %v498
    %500 = vdwg.mxu0
    %501 = vmatpush.msra.mxu0 %v195
    %502 = vmatpush.msra.mxu0 %v187
    %503 = vmatpush.msra.mxu0 %v179
    %504 = vmatpush.msra.mxu0 %v171
    %505 = vmatpush.msra.mxu0 %v163
    %506 = vmatpush.msra.mxu0 %v155
    %507 = vmatpush.msra.mxu0 %v147
    %508 = vmatpush.msra.mxu0 %v139
    %509 = vmatpush.msra.mxu0 %v131
    %510 = vmatpush.msra.mxu0 %v123
    %511 = vmatpush.msra.mxu0 %v115
    %512 = vmatpush.msra.mxu0 %v107
    %513 = vmatpush.msra.mxu0 %v99
    %514 = vmatpush.msra.mxu0 %v91
    %515 = vmatpush.msra.mxu0 %v83
    %516 = vmatpush.msra.mxu0 %v75
    %517 = vmatmul.f32.gmra.mxu0 %v60
    %v518 = vpop.f32.mrf.mxu0
    %v519 = vadd.f32 %v205, %v518
    %520 = vmatmul.f32.gmra.mxu0 %v61
    %v521 = vpop.f32.mrf.mxu0
    %v522 = vadd.f32 %v205, %v521
    %523 = vmatmul.f32.gmra.mxu0 %v62
    %v524 = vpop.f32.mrf.mxu0
    %v525 = vadd.f32 %v205, %v524
    %526 = vmatmul.f32.gmra.mxu0 %v63
    %v527 = vpop.f32.mrf.mxu0
    %v528 = vadd.f32 %v205, %v527
    %529 = vmatmul.f32.gmra.mxu0 %v64
    %v530 = vpop.f32.mrf.mxu0
    %v531 = vadd.f32 %v205, %v530
    %532 = vmatmul.f32.gmra.mxu0 %v65
    %v533 = vpop.f32.mrf.mxu0
    %v534 = vadd.f32 %v205, %v533
    %535 = vmatmul.f32.gmra.mxu0 %v66
    %v536 = vpop.f32.mrf.mxu0
    %v537 = vadd.f32 %v205, %v536
    %538 = vmatmul.f32.gmra.mxu0 %v67
    %v539 = vpop.f32.mrf.mxu0
    %v540 = vadd.f32 %v205, %v539
    %541 = vdwg.mxu0
    %542 = vst [vmem:[#allocation8] sm:$0xff] %v232
    %543 = vst [vmem:[#allocation8 + $0x8] sm:$0xff] %v273
    %544 = vst [vmem:[#allocation8 + $0x10] sm:$0xff] %v314
    %545 = vst [vmem:[#allocation8 + $0x18] sm:$0xff] %v355
    %546 = vst [vmem:[#allocation8 + $0x20] sm:$0xff] %v396
    %547 = vst [vmem:[#allocation8 + $0x28] sm:$0xff] %v437
    %548 = vst [vmem:[#allocation8 + $0x30] sm:$0xff] %v478
    %549 = vst [vmem:[#allocation8 + $0x38] sm:$0xff] %v519
    %550 = vst [vmem:[#allocation8 + $0x40] sm:$0xff] %v235
    %551 = vst [vmem:[#allocation8 + $0x48] sm:$0xff] %v276
    %552 = vst [vmem:[#allocation8 + $0x50] sm:$0xff] %v317
    %553 = vst [vmem:[#allocation8 + $0x58] sm:$0xff] %v358
    %554 = vst [vmem:[#allocation8 + $0x60] sm:$0xff] %v399
    %555 = vst [vmem:[#allocation8 + $0x68] sm:$0xff] %v440
    %556 = vst [vmem:[#allocation8 + $0x70] sm:$0xff] %v481
    %557 = vst [vmem:[#allocation8 + $0x78] sm:$0xff] %v522
    %558 = vst [vmem:[#allocation8 + $0x80] sm:$0xff] %v238
    %559 = vst [vmem:[#allocation8 + $0x88] sm:$0xff] %v279
    %560 = vst [vmem:[#allocation8 + $0x90] sm:$0xff] %v320
    %561 = vst [vmem:[#allocation8 + $0x98] sm:$0xff] %v361
    %562 = vst [vmem:[#allocation8 + $0xa0] sm:$0xff] %v402
    %563 = vst [vmem:[#allocation8 + $0xa8] sm:$0xff] %v443
    %564 = vst [vmem:[#allocation8 + $0xb0] sm:$0xff] %v484
    %565 = vst [vmem:[#allocation8 + $0xb8] sm:$0xff] %v525
    %566 = vst [vmem:[#allocation8 + $0xc0] sm:$0xff] %v241
    %567 = vst [vmem:[#allocation8 + $0xc8] sm:$0xff] %v282
    %568 = vst [vmem:[#allocation8 + $0xd0] sm:$0xff] %v323
    %569 = vst [vmem:[#allocation8 + $0xd8] sm:$0xff] %v364
    %570 = vst [vmem:[#allocation8 + $0xe0] sm:$0xff] %v405
    %571 = vst [vmem:[#allocation8 + $0xe8] sm:$0xff] %v446
    %572 = vst [vmem:[#allocation8 + $0xf0] sm:$0xff] %v487
    %573 = vst [vmem:[#allocation8 + $0xf8] sm:$0xff] %v528
    %574 = vst [vmem:[#allocation8 + $0x100] sm:$0xff] %v244
    %575 = vst [vmem:[#allocation8 + $0x108] sm:$0xff] %v285
    %576 = vst [vmem:[#allocation8 + $0x110] sm:$0xff] %v326
    %577 = vst [vmem:[#allocation8 + $0x118] sm:$0xff] %v367
    %578 = vst [vmem:[#allocation8 + $0x120] sm:$0xff] %v408
    %579 = vst [vmem:[#allocation8 + $0x128] sm:$0xff] %v449
    %580 = vst [vmem:[#allocation8 + $0x130] sm:$0xff] %v490
    %581 = vst [vmem:[#allocation8 + $0x138] sm:$0xff] %v531
    %582 = vst [vmem:[#allocation8 + $0x140] sm:$0xff] %v247
    %583 = vst [vmem:[#allocation8 + $0x148] sm:$0xff] %v288
    %584 = vst [vmem:[#allocation8 + $0x150] sm:$0xff] %v329
    %585 = vst [vmem:[#allocation8 + $0x158] sm:$0xff] %v370
    %586 = vst [vmem:[#allocation8 + $0x160] sm:$0xff] %v411
    %587 = vst [vmem:[#allocation8 + $0x168] sm:$0xff] %v452
    %588 = vst [vmem:[#allocation8 + $0x170] sm:$0xff] %v493
    %589 = vst [vmem:[#allocation8 + $0x178] sm:$0xff] %v534
    %590 = vst [vmem:[#allocation8 + $0x180] sm:$0xff] %v250
    %591 = vst [vmem:[#allocation8 + $0x188] sm:$0xff] %v291
    %592 = vst [vmem:[#allocation8 + $0x190] sm:$0xff] %v332
    %593 = vst [vmem:[#allocation8 + $0x198] sm:$0xff] %v373
    %594 = vst [vmem:[#allocation8 + $0x1a0] sm:$0xff] %v414
    %595 = vst [vmem:[#allocation8 + $0x1a8] sm:$0xff] %v455
    %596 = vst [vmem:[#allocation8 + $0x1b0] sm:$0xff] %v496
    %597 = vst [vmem:[#allocation8 + $0x1b8] sm:$0xff] %v537
    %598 = vst [vmem:[#allocation8 + $0x1c0] sm:$0xff] %v253
    %599 = vst [vmem:[#allocation8 + $0x1c8] sm:$0xff] %v294
    %600 = vst [vmem:[#allocation8 + $0x1d0] sm:$0xff] %v335
    %601 = vst [vmem:[#allocation8 + $0x1d8] sm:$0xff] %v376
    %602 = vst [vmem:[#allocation8 + $0x1e0] sm:$0xff] %v417
    %603 = vst [vmem:[#allocation8 + $0x1e8] sm:$0xff] %v458
    %604 = vst [vmem:[#allocation8 + $0x1f0] sm:$0xff] %v499
    %605 = vst [vmem:[#allocation8 + $0x1f8] sm:$0xff] %v540
    // Predicated region
    $region26: #{tpu_custom_call.1} parent=1 // pred_check
      _
    $region27: #{tpu_custom_call.1} parent=1 // pred_check_branch
      %607 = sbr.rel (0) target = $region29
    $region28: #{tpu_custom_call.1} parent=1 // pred_region
      %609 = vsyncadd [#allocation4], 0
      %s610 = sshll.u32 [#allocation8], 4
      %s611 = int_to_ptr.vmem [resolvable:$true] %s610
      %s612 = sshll.u32 %s3, 4
      %s613 = int_to_ptr.hbm [resolvable:$true] %s612
      %618 = dma.vmem_to_hbm [thread:$0]  %s611, 8192, %s613, [#allocation4], 1024, 1024, 64
    $region29: #{tpu_custom_call.1} parent=1 // pred_fallthru
      _
    // Predicated region
    $region30: #{tpu_custom_call.1} parent=1 // pred_check
      _
    $region31: #{tpu_custom_call.1} parent=1 // pred_check_branch
      %620 = sbr.rel (0) target = $region33
    $region32: #{tpu_custom_call.1} parent=1 // pred_region
      %622 = dma.done [#allocation4], 8192
    $region33: #{tpu_custom_call.1} parent=1 // pred_fallthru
      _
    %623 = vsyncpa [#allocation3], 1
    %624 = vsyncpa [#allocation6], 1
    %625 = vsyncpa [#allocation4], 1

</llo_original>
